<compile_context>
chip_gen: v7x
topology: tpu7x:2x2x1
jax: 0.10.0
libtpu: 0.0.40
codegen_flags: <defaults>
</compile_context>

<pallas_src>
import functools

import jax
import jax.numpy as jnp
from jax import lax
from jax.experimental import pallas as pl
from jax.experimental.pallas import tpu as pltpu


_INV_SQRT2 = 0.7071067811865476
_SQRT_2_OVER_PI = 0.7978845608028654


def _round_up(n, m):
    return ((n + m - 1) // m) * m


def _erf_approx_f32(v):
    """erf via Abramowitz & Stegun 7.1.26, |error| <= 1.5e-7.

    Uses only abs / mul / add / div / exp, which lower on every TPU generation
    (no dependence on a lax.erf Mosaic lowering)."""
    a1 = jnp.float32(0.254829592)
    a2 = jnp.float32(-0.284496736)
    a3 = jnp.float32(1.421413741)
    a4 = jnp.float32(-1.453152027)
    a5 = jnp.float32(1.061405429)
    p = jnp.float32(0.3275911)
    sgn = jnp.where(v >= 0.0, jnp.float32(1.0), jnp.float32(-1.0))
    av = jnp.abs(v)
    t = 1.0 / (1.0 + p * av)
    poly = ((((a5 * t + a4) * t + a3) * t + a2) * t + a1) * t
    return sgn * (1.0 - poly * jnp.exp(-(av * av)))


def _gelu(h, approximate):
    if approximate:
        # tanh form: tanh runs on the EUP (separate VLIW slot), relieving the
        # VALU; deviates from the exact erf form by <= ~1e-3.
        c = jnp.float32(_SQRT_2_OVER_PI)
        return 0.5 * h * (1.0 + jnp.tanh(c * (h + 0.044715 * h * h * h)))
    # Exact GELU: 0.5 * x * (1 + erf(x / sqrt(2)))  (matches torch "gelu").
    return 0.5 * h * (1.0 + _erf_approx_f32(h * jnp.float32(_INV_SQRT2)))


def _pick_dslab(D):
    """Largest D-slab (multiple of 128, <= 512) that divides D; else one slab."""
    for c in (512, 384, 256, 128):
        if D % c == 0:
            return c
    return D


def classifier_kernel(x_ref, w1_ref, b1_ref, w2_ref, b2_ref, o_ref, *,
                      compute_dtype, d_slab, num_d_slabs, gelu_approximate):
    # x_ref:  (TM, H)   row tile of the flattened input (f32 in HBM, cast here)
    # w1_ref: (H, D)    linear1 weight stored (in, out), pre-cast to compute_dtype
    # b1_ref: (1, D)    linear1 bias (f32)
    # w2_ref: (1, D)    linear2 weight, torch layout (out=1, in=D), f32
    # b2_ref: (1,)      linear2 bias, SMEM scalar
    # o_ref:  (1, TM)   lane-dense sigmoid scores for this row tile
    #
    # TODO(synk): dropout1/dropout2 are stochastic only in training mode; at
    # inference they are identity, which is what is implemented here.
    tm = x_ref.shape[0]
    x = x_ref[...].astype(compute_dtype)

    y_col = jnp.zeros((tm, 1), jnp.float32)
    # Static (trace-time) unroll over D-slabs: fuses matmul1 -> GELU -> partial
    # matmul2 so the full (TM, D) f32 hidden is never materialized in VMEM.
    for j in range(num_d_slabs):
        lo = j * d_slab
        hi = lo + d_slab
        w1_s = w1_ref[:, lo:hi]                         # (H, d_slab), static slice
        h = jnp.dot(x, w1_s, preferred_element_type=jnp.float32)
        h = h + b1_ref[:, lo:hi]
        h = _gelu(h, gelu_approximate)
        # linear2 partial: (TM, d_slab) contracted with (1, d_slab) on the last
        # dim -> (TM, 1).  The big h operand is already in canonical (M, K) MXU
        # form, so only the tiny w2 slice needs relayout (no vxpose of h).
        y_col = y_col + lax.dot_general(
            h, w2_ref[:, lo:hi],
            dimension_numbers=(((1,), (1,)), ((), ())),
            preferred_element_type=jnp.float32)

    # Tiny (TM, 1) -> (1, TM) relayout so the bias/sigmoid run on dense vregs and
    # the store is lane-dense and unmasked.
    y_row = jnp.transpose(y_col, (1, 0)) + b2_ref[0]
    o_ref[...] = (1.0 / (1.0 + jnp.exp(-y_row))).astype(o_ref.dtype)


def _estimate_vmem_bytes(tm, H, D, d_slab, compute_dtype):
    ci = jnp.dtype(compute_dtype).itemsize
    lane = lambda n: _round_up(max(int(n), 1), 128)
    sub = lambda n: _round_up(max(int(n), 1), 8)
    b = 0
    b += 2 * sub(tm) * lane(H) * 4        # x tile, double-buffered (f32 from HBM)
    b += sub(tm) * lane(H) * ci           # in-kernel cast of the x tile
    b += 2 * sub(H) * lane(D) * ci        # W1 (conservatively double-buffered)
    b += 2 * sub(1) * lane(D) * 4         # b1
    b += 2 * sub(1) * lane(D) * 4         # w2 row
    b += 2 * sub(1) * lane(tm) * 4        # output tile, double-buffered
    b += 3 * sub(tm) * lane(d_slab) * 4   # h slab + elementwise temporaries
    b += 2 * sub(tm) * lane(1) * 4        # y accumulator
    return b


def classifier_forward(x, w1, b1, w2, b2, *, tm=None,
                       compute_dtype=jnp.bfloat16, gelu_approximate=False,
                       vmem_limit_bytes=None):
    """x: (B, S, H).  Returns sent_scores: (B, S) float32.

    w1: (H, D), b1: (D,), w2: (1, D)/(D, 1)/(D,), b2: (1,) or scalar.
    compute_dtype applies to the first (dominant) matmul; accumulation is f32.
    """
    B, S, H = x.shape
    D = w1.shape[1]
    M = B * S

    # Device VMEM capacity (for tm default and the scoped-VMEM budget).
    try:
        vmem_cap = int(pltpu.get_tpu_info().vmem_capacity_bytes)
    except Exception:  # conservative fallback (safe on v5e/v6e/v7x)
        vmem_cap = 64 << 20

    if tm is None:
        tm = 1024 if vmem_cap >= (96 << 20) else 512   # v5e/v6e vs v7x

    # Flattened view of x: free reshape, no cast, no pad (avoids an extra HBM
    # round trip over the whole input).  Only the tiny-input case is padded so
    # every block dim stays <= the array dim.
    x2d = x.reshape(M, H)
    M_rows = M
    if M_rows < 128:
        x2d = jnp.pad(x2d, ((0, 128 - M_rows), (0, 0)))
        M_rows = 128

    # Row tile: multiple of 128 (lane-dense output), <= M_rows, and >= 2 tiles
    # when possible so v7x's two TensorCores both get work on the parallel axis.
    tm = max(128, (int(tm) // 128) * 128)
    tm = min(tm, (M_rows // 128) * 128)
    if M_rows >= 256 and pl.cdiv(M_rows, tm) < 2:
        tm = max(128, ((M_rows // 2) // 128) * 128)
    num_tiles = pl.cdiv(M_rows, tm)

    d_slab = _pick_dslab(D)
    num_d_slabs = D // d_slab

    # Weights are tiny relative to x and fetched once -> pre-cast/reshape here.
    w1_c = jnp.asarray(w1, compute_dtype)                 # (H, D)
    b1_2d = jnp.asarray(b1, jnp.float32).reshape(1, D)
    w2_row = jnp.asarray(w2, jnp.float32).reshape(1, D)
    b2_1d = jnp.asarray(b2, jnp.float32).reshape(1)

    if vmem_limit_bytes is None:
        est = _estimate_vmem_bytes(tm, H, D, d_slab, compute_dtype)
        want = int(est * 1.5) + (2 << 20)
        vmem_limit_bytes = max(min(want, (vmem_cap * 9) // 10), 16 << 20)

    kernel = functools.partial(
        classifier_kernel,
        compute_dtype=compute_dtype,
        d_slab=d_slab,
        num_d_slabs=num_d_slabs,
        gelu_approximate=gelu_approximate,
    )

    out = pl.pallas_call(
        kernel,
        out_shape=jax.ShapeDtypeStruct((1, num_tiles * tm), jnp.float32),
        grid_spec=pltpu.PrefetchScalarGridSpec(
            num_scalar_prefetch=0,
            grid=(num_tiles,),
            in_specs=[
                pl.BlockSpec((tm, H), lambda i: (i, 0)),        # x row tile
                pl.BlockSpec((H, D), lambda i: (0, 0)),         # W1 (resident)
                pl.BlockSpec((1, D), lambda i: (0, 0)),         # b1
                pl.BlockSpec((1, D), lambda i: (0, 0)),         # W2 row
                pl.BlockSpec(memory_space=pltpu.MemorySpace.SMEM),  # b2 scalar
            ],
            out_specs=pl.BlockSpec((1, tm), lambda i: (0, i)),  # lane-dense scores
        ),
        compiler_params=pltpu.CompilerParams(
            dimension_semantics=("parallel",),
            vmem_limit_bytes=vmem_limit_bytes,
        ),
    )(x2d, w1_c, b1_2d, w2_row, b2_1d)

    return out[0, :M].reshape(B, S)


def init_params(key, web_hidden_size, linear_hidden):
    """Deterministic init mimicking nn.Linear's default (uniform +-1/sqrt(fan_in))."""
    k1, k2, k3, k4 = jax.random.split(key, 4)
    bound1 = 1.0 / float(web_hidden_size) ** 0.5
    bound2 = 1.0 / float(linear_hidden) ** 0.5
    # W1 stored as (in, out) so the kernel does x @ W1 directly.
    w1 = jax.random.uniform(k1, (web_hidden_size, linear_hidden),
                            jnp.float32, -bound1, bound1)
    b1 = jax.random.uniform(k2, (linear_hidden,), jnp.float32, -bound1, bound1)
    # W2 stored in torch layout (out_features=1, in_features=linear_hidden).
    w2 = jax.random.uniform(k3, (1, linear_hidden), jnp.float32, -bound2, bound2)
    b2 = jax.random.uniform(k4, (1,), jnp.float32, -bound2, bound2)
    return w1, b1, w2, b2


if __name__ == "__main__":
    # Small shapes consistent with the module: (batch, seq, web_hidden_size).
    B, S, H = 2, 8, 32
    D = 64  # linear_hidden (module default is 1536; scaled down for the demo)

    key = jax.random.PRNGKey(0)
    kx, kp = jax.random.split(key)
    x = jax.random.normal(kx, (B, S, H), jnp.float32)
    w1, b1, w2, b2 = init_params(kp, H, D)

    # Pure-JAX reference (exact erf-GELU + sigmoid).
    h_ref = x.reshape(-1, H) @ w1 + b1
    h_ref = 0.5 * h_ref * (1.0 + lax.erf(h_ref * _INV_SQRT2))
    logits = h_ref @ w2.reshape(D, 1) + b2.reshape(1, 1)
    y_ref = (1.0 / (1.0 + jnp.exp(-logits))).reshape(B, S)

    # Strict correctness check with f32 compute.
    scores_f32 = classifier_forward(x, w1, b1, w2, b2, compute_dtype=jnp.float32)
    scores_f32 = jax.block_until_ready(scores_f32)
    assert scores_f32.shape == (B, S)
    assert jnp.allclose(scores_f32, y_ref, atol=1e-4, rtol=1e-4)

    # Default path (bf16 matmul, f32 accumulation): looser tolerance.
    scores_bf16 = classifier_forward(x, w1, b1, w2, b2)
    scores_bf16 = jax.block_until_ready(scores_bf16)
    assert scores_bf16.shape == (B, S)
    assert jnp.allclose(scores_bf16, y_ref, atol=2e-2, rtol=0.0)

    print("KERNEL_OK")
</pallas_src>

<mosaic_0001>
module attributes {stable_mosaic.version = 11 : i64} {
  func.func @classifier_kernel(%arg0: i32, %arg1: memref<128x32xf32, #tpu.memory_space<vmem>>, %arg2: memref<32x64xf32, #tpu.memory_space<vmem>>, %arg3: memref<1x64xf32, #tpu.memory_space<vmem>>, %arg4: memref<1x64xf32, #tpu.memory_space<vmem>>, %arg5: memref<1xf32, #tpu.memory_space<smem>>, %arg6: memref<1x128xf32, #tpu.memory_space<vmem>>) attributes {dimension_semantics = [#tpu.dimension_semantics<parallel>], iteration_bounds = array<i64: 1>, scalar_prefetch = 0 : i64, scratch_operands = 0 : i64, tpu.core_type = #tpu.core_type<tc>, window_params = [{transform_indices = @transform_0, window_bounds = array<i64: 128, 32>}, {pipeline_mode = #tpu.pipeline_mode<synchronous>, transform_indices = @transform_1, window_bounds = array<i64: 32, 64>}, {pipeline_mode = #tpu.pipeline_mode<synchronous>, transform_indices = @transform_2, window_bounds = array<i64: 1, 64>}, {pipeline_mode = #tpu.pipeline_mode<synchronous>, transform_indices = @transform_3, window_bounds = array<i64: 1, 64>}, {transform_indices = @transform_4, window_bounds = array<i64: 1>}, {transform_indices = @transform_5, window_bounds = array<i64: 1, 128>}]} {
    %c0 = arith.constant 0 : index
    %c0_0 = arith.constant 0 : index
    %0 = vector.load %arg1[%c0, %c0_0] : memref<128x32xf32, #tpu.memory_space<vmem>>, vector<128x32xf32>
    %cst = arith.constant 0.000000e+00 : f32
    %1 = vector.broadcast %cst : f32 to vector<128x1xf32>
    %c0_1 = arith.constant 0 : index
    %c0_2 = arith.constant 0 : index
    %2 = vector.load %arg2[%c0_1, %c0_2] : memref<32x64xf32, #tpu.memory_space<vmem>>, vector<32x64xf32>
    %cst_3 = arith.constant dense<0.000000e+00> : vector<128x64xf32>
    %3 = tpu.matmul %0, %2, %cst_3 {dimension_numbers = #tpu.dot_dimension_numbers<[1], [0], [0], [1], [0, 0, 1, 1], [], []>} : vector<128x32xf32>, vector<32x64xf32>, vector<128x64xf32> -> vector<128x64xf32>
    %c0_4 = arith.constant 0 : index
    %c0_5 = arith.constant 0 : index
    %4 = vector.load %arg3[%c0_4, %c0_5] : memref<1x64xf32, #tpu.memory_space<vmem>>, vector<1x64xf32>
    %5 = vector.broadcast %4 : vector<1x64xf32> to vector<128x64xf32>
    %6 = arith.addf %3, %5 : vector<128x64xf32>
    %cst_6 = arith.constant 5.000000e-01 : f32
    %7 = vector.broadcast %cst_6 : f32 to vector<128x64xf32>
    %8 = arith.mulf %7, %6 : vector<128x64xf32>
    %cst_7 = arith.constant 0.707106769 : f32
    %9 = vector.broadcast %cst_7 : f32 to vector<128x64xf32>
    %10 = arith.mulf %6, %9 : vector<128x64xf32>
    %cst_8 = arith.constant 0.000000e+00 : f32
    %11 = vector.broadcast %cst_8 : f32 to vector<128x64xf32>
    %12 = arith.cmpf oge, %10, %11 : vector<128x64xf32>
    %cst_9 = arith.constant 1.000000e+00 : f32
    %cst_10 = arith.constant -1.000000e+00 : f32
    %13 = vector.broadcast %cst_9 : f32 to vector<128x64xf32>
    %14 = vector.broadcast %cst_10 : f32 to vector<128x64xf32>
    %15 = arith.select %12, %13, %14 : vector<128x64xi1>, vector<128x64xf32>
    %16 = math.absf %10 : vector<128x64xf32>
    %cst_11 = arith.constant 0.327591091 : f32
    %17 = vector.broadcast %cst_11 : f32 to vector<128x64xf32>
    %18 = arith.mulf %17, %16 : vector<128x64xf32>
    %cst_12 = arith.constant 1.000000e+00 : f32
    %19 = vector.broadcast %cst_12 : f32 to vector<128x64xf32>
    %20 = arith.addf %19, %18 : vector<128x64xf32>
    %cst_13 = arith.constant 1.000000e+00 : f32
    %21 = vector.broadcast %cst_13 : f32 to vector<128x64xf32>
    %22 = arith.divf %21, %20 : vector<128x64xf32>
    %cst_14 = arith.constant 1.06140542 : f32
    %23 = vector.broadcast %cst_14 : f32 to vector<128x64xf32>
    %24 = arith.mulf %23, %22 : vector<128x64xf32>
    %cst_15 = arith.constant -1.45315206 : f32
    %25 = vector.broadcast %cst_15 : f32 to vector<128x64xf32>
    %26 = arith.addf %24, %25 : vector<128x64xf32>
    %27 = arith.mulf %26, %22 : vector<128x64xf32>
    %cst_16 = arith.constant 1.42141378 : f32
    %28 = vector.broadcast %cst_16 : f32 to vector<128x64xf32>
    %29 = arith.addf %27, %28 : vector<128x64xf32>
    %30 = arith.mulf %29, %22 : vector<128x64xf32>
    %cst_17 = arith.constant -0.284496725 : f32
    %31 = vector.broadcast %cst_17 : f32 to vector<128x64xf32>
    %32 = arith.addf %30, %31 : vector<128x64xf32>
    %33 = arith.mulf %32, %22 : vector<128x64xf32>
    %cst_18 = arith.constant 0.254829586 : f32
    %34 = vector.broadcast %cst_18 : f32 to vector<128x64xf32>
    %35 = arith.addf %33, %34 : vector<128x64xf32>
    %36 = arith.mulf %35, %22 : vector<128x64xf32>
    %37 = arith.mulf %16, %16 : vector<128x64xf32>
    %cst_19 = arith.constant 0.000000e+00 : f32
    %38 = vector.broadcast %cst_19 : f32 to vector<128x64xf32>
    %39 = arith.subf %38, %37 : vector<128x64xf32>
    %40 = math.exp %39 : vector<128x64xf32>
    %41 = arith.mulf %36, %40 : vector<128x64xf32>
    %cst_20 = arith.constant 1.000000e+00 : f32
    %42 = vector.broadcast %cst_20 : f32 to vector<128x64xf32>
    %43 = arith.subf %42, %41 : vector<128x64xf32>
    %44 = arith.mulf %15, %43 : vector<128x64xf32>
    %cst_21 = arith.constant 1.000000e+00 : f32
    %45 = vector.broadcast %cst_21 : f32 to vector<128x64xf32>
    %46 = arith.addf %45, %44 : vector<128x64xf32>
    %47 = arith.mulf %8, %46 : vector<128x64xf32>
    %c0_22 = arith.constant 0 : index
    %c0_23 = arith.constant 0 : index
    %48 = vector.load %arg4[%c0_22, %c0_23] : memref<1x64xf32, #tpu.memory_space<vmem>>, vector<1x64xf32>
    %cst_24 = arith.constant dense<0.000000e+00> : vector<128x1xf32>
    %49 = tpu.matmul %47, %48, %cst_24 {dimension_numbers = #tpu.dot_dimension_numbers<[1], [1], [0], [0], [0, 0, 1, 0], [], []>} : vector<128x64xf32>, vector<1x64xf32>, vector<128x1xf32> -> vector<128x1xf32>
    %50 = arith.addf %1, %49 : vector<128x1xf32>
    %51 = tpu.transpose %50, [1, 0] : vector<128x1xf32> -> vector<1x128xf32>
    %c0_25 = arith.constant 0 : index
    %52 = memref.load %arg5[%c0_25] : memref<1xf32, #tpu.memory_space<smem>>
    %53 = vector.broadcast %52 : f32 to vector<1x128xf32>
    %54 = arith.addf %51, %53 : vector<1x128xf32>
    %cst_26 = arith.constant 0.000000e+00 : f32
    %55 = vector.broadcast %cst_26 : f32 to vector<1x128xf32>
    %56 = arith.subf %55, %54 : vector<1x128xf32>
    %57 = math.exp %56 : vector<1x128xf32>
    %cst_27 = arith.constant 1.000000e+00 : f32
    %58 = vector.broadcast %cst_27 : f32 to vector<1x128xf32>
    %59 = arith.addf %58, %57 : vector<1x128xf32>
    %cst_28 = arith.constant 1.000000e+00 : f32
    %60 = vector.broadcast %cst_28 : f32 to vector<1x128xf32>
    %61 = arith.divf %60, %59 : vector<1x128xf32>
    %c0_29 = arith.constant 0 : index
    %c0_30 = arith.constant 0 : index
    %62 = vector.load %arg6[%c0_29, %c0_30] : memref<1x128xf32, #tpu.memory_space<vmem>>, vector<1x128xf32>
    tpu.vector_store %arg6[%c0_29, %c0_30], %61 {strides = array<i32>} : memref<1x128xf32, #tpu.memory_space<vmem>>, vector<1x128xf32>,
    return
  }
  func.func @transform_0(%arg0: i32) -> (i32, i32) {
    %c0_i32 = arith.constant 0 : i32
    %c0_i32_0 = arith.constant 0 : i32
    return %arg0, %c0_i32 : i32, i32
  }
  func.func @transform_1(%arg0: i32) -> (i32, i32) {
    %c0_i32 = arith.constant 0 : i32
    %c0_i32_0 = arith.constant 0 : i32
    %c0_i32_1 = arith.constant 0 : i32
    return %c0_i32, %c0_i32_0 : i32, i32
  }
  func.func @transform_2(%arg0: i32) -> (i32, i32) {
    %c0_i32 = arith.constant 0 : i32
    %c0_i32_0 = arith.constant 0 : i32
    %c0_i32_1 = arith.constant 0 : i32
    return %c0_i32, %c0_i32_0 : i32, i32
  }
  func.func @transform_3(%arg0: i32) -> (i32, i32) {
    %c0_i32 = arith.constant 0 : i32
    %c0_i32_0 = arith.constant 0 : i32
    %c0_i32_1 = arith.constant 0 : i32
    return %c0_i32, %c0_i32_0 : i32, i32
  }
  func.func @transform_4(%arg0: i32) -> i32 {
    %c0_i32 = arith.constant 0 : i32
    %c0_i32_0 = arith.constant 0 : i32
    return %c0_i32 : i32
  }
  func.func @transform_5(%arg0: i32) -> (i32, i32) {
    %c0_i32 = arith.constant 0 : i32
    %c0_i32_0 = arith.constant 0 : i32
    return %c0_i32, %arg0 : i32, i32
  }
}

</mosaic_0001>

<llo_original>
// kernel: tpu_custom_call.1
$region0: #{tpu_custom_call.1}
  #allocation0 [shape = 'u32[]', space=smem, size = 0x4, offset = 0x4, fixed_abs, tag = 'smem constant byte address 0x4 - core index']
  #allocation1 [shape = 'u32[144,128]{1,0:T(1,128)}', space=vmem, size = 0x12000, scoped, tag = 'internal scratch']
  #allocation2 [shape = 'f32[1]{0:T(128)S(6)}', space=smem, size = 0x200, scoped, tag = 'scoped memory for tpu_custom_call.1']
  %s0 = inlined_call_operand.vmem [shape: f32[128,32], index: 0, kind: input, shape index: {}]
  %s1 = inlined_call_operand.vmem [shape: f32[32,64], index: 1, kind: input, shape index: {}]
  %s2 = inlined_call_operand.vmem [shape: f32[1,64], index: 2, kind: input, shape index: {}]
  %s3 = inlined_call_operand.vmem [shape: f32[1,64], index: 3, kind: input, shape index: {}]
  %s4 = inlined_call_operand.<no memory space> [shape: f32[1], index: 4, kind: input, shape index: {}]
  %s5 = inlined_call_operand.hbm [shape: f32[1,128], index: 5, kind: output, shape index: {}]
  %s6 = sld [smem:[#allocation0]]
  $region30: #{tpu_custom_call.1} parent=0
    _
  %s8 = ssub.s32 1, %s6
  %s9 = scalar_select 0, %s8, %s6
  %10 = sst [smem:[#allocation2]] %s4
  $region1: #{tpu_custom_call.1} parent=0
    #allocation3 [shape = 'u8[512]{0}', space=vmem, size = 0x400, scoped, tag = 'output window, operand 0, single buffered']
    #allocation4 [shape = 's32[1]{0}', space=sflag, size = 0x4, scoped, tag = 'scoped memory for tpu_custom_call.1']
    %11 = vsyncpa [#allocation4], 0
    // Predicated region
    $region2: #{tpu_custom_call.1} parent=1 // pred_check
      _
    $region3: #{tpu_custom_call.1} parent=1 // pred_check_branch
      %13 = sbr.rel (0) target = $region5
    $region4: #{tpu_custom_call.1} parent=1 // pred_region
      _
    $region5: #{tpu_custom_call.1} parent=1 // pred_fallthru
      _
    // Predicated region
    $region6: #{tpu_custom_call.1} parent=1 // pred_check
      _
    $region7: #{tpu_custom_call.1} parent=1 // pred_check_branch
      %15 = sbr.rel (0) target = $region9
    $region8: #{tpu_custom_call.1} parent=1 // pred_region
      _
    $region9: #{tpu_custom_call.1} parent=1 // pred_fallthru
      _
    // Predicated region
    $region10: #{tpu_custom_call.1} parent=1 // pred_check
      _
    $region11: #{tpu_custom_call.1} parent=1 // pred_check_branch
      %17 = sbr.rel (0) target = $region13
    $region12: #{tpu_custom_call.1} parent=1 // pred_region
      _
    $region13: #{tpu_custom_call.1} parent=1 // pred_fallthru
      _
    // Predicated region
    $region14: #{tpu_custom_call.1} parent=1 // pred_check
      _
    $region15: #{tpu_custom_call.1} parent=1 // pred_check_branch
      %19 = sbr.rel (0) target = $region17
    $region16: #{tpu_custom_call.1} parent=1 // pred_region
      _
    $region17: #{tpu_custom_call.1} parent=1 // pred_fallthru
      _
    // Predicated region
    $region18: #{tpu_custom_call.1} parent=1 // pred_check
      _
    $region19: #{tpu_custom_call.1} parent=1 // pred_check_branch
      %21 = sbr.rel (0) target = $region21
    $region20: #{tpu_custom_call.1} parent=1 // pred_region
      _
    $region21: #{tpu_custom_call.1} parent=1 // pred_fallthru
      _
    %v22 = vld [vmem:[%s0] sm:$0xff]
    %v23 = vld [vmem:[%s0 + $0x8] sm:$0xff]
    %v24 = vld [vmem:[%s0 + $0x10] sm:$0xff]
    %v25 = vld [vmem:[%s0 + $0x18] sm:$0xff]
    %v26 = vld [vmem:[%s0 + $0x20] sm:$0xff]
    %v27 = vld [vmem:[%s0 + $0x28] sm:$0xff]
    %v28 = vld [vmem:[%s0 + $0x30] sm:$0xff]
    %v29 = vld [vmem:[%s0 + $0x38] sm:$0xff]
    %v30 = vld [vmem:[%s0 + $0x40] sm:$0xff]
    %v31 = vld [vmem:[%s0 + $0x48] sm:$0xff]
    %v32 = vld [vmem:[%s0 + $0x50] sm:$0xff]
    %v33 = vld [vmem:[%s0 + $0x58] sm:$0xff]
    %v34 = vld [vmem:[%s0 + $0x60] sm:$0xff]
    %v35 = vld [vmem:[%s0 + $0x68] sm:$0xff]
    %v36 = vld [vmem:[%s0 + $0x70] sm:$0xff]
    %v37 = vld [vmem:[%s0 + $0x78] sm:$0xff]
    %v38 = vld [vmem:[%s1] sm:$0xff]
    %v39 = vld [vmem:[%s1 + $0x8] sm:$0xff]
    %v40 = vld [vmem:[%s1 + $0x10] sm:$0xff]
    %v41 = vld [vmem:[%s1 + $0x18] sm:$0xff]
    %v42 = vld [vmem:[%s2] sm:$0x1]
    %v44 = vlaneseq
    %v45 = vshrl.u32 %v44, 7
    %v46 = vsub.s32 0, %v45
    %v47 = vrot.slane %v42, %v46
    %vm49 = vcmask 261120
    %v51 = vsel %vm49, %v22, 0
    %v54 = vsel %vm49, %v23, 0
    %v57 = vsel %vm49, %v24, 0
    %v60 = vsel %vm49, %v25, 0
    %v63 = vsel %vm49, %v26, 0
    %v66 = vsel %vm49, %v27, 0
    %v69 = vsel %vm49, %v28, 0
    %v72 = vsel %vm49, %v29, 0
    %v75 = vsel %vm49, %v30, 0
    %v78 = vsel %vm49, %v31, 0
    %v81 = vsel %vm49, %v32, 0
    %v84 = vsel %vm49, %v33, 0
    %v87 = vsel %vm49, %v34, 0
    %v90 = vsel %vm49, %v35, 0
    %v93 = vsel %vm49, %v36, 0
    %v96 = vsel %vm49, %v37, 0
    %98 = vmatprep.subr.mxu0 0.0
    %99 = vmatpush1.msra.mxu0 %v38
    %100 = vmatprep.subr.mxu0 0.0
    %101 = vmatpush1.msra.mxu0 %v39
    %102 = vmatprep.subr.mxu0 0.0
    %103 = vmatpush1.msra.mxu0 %v40
    %104 = vmatprep.subr.mxu0 0.0
    %105 = vmatpush1.msra.mxu0 %v41
    %106 = vmatprep.subr.mxu0 0.0
    %107 = vmatpush1.msra.mxu0 0.0
    %108 = vmatprep.subr.mxu0 0.0
    %109 = vmatpush1.msra.mxu0 0.0
    %110 = vmatprep.subr.mxu0 0.0
    %111 = vmatpush1.msra.mxu0 0.0
    %112 = vmatprep.subr.mxu0 0.0
    %113 = vmatpush1.msra.mxu0 0.0
    %114 = vmatprep.subr.mxu0 0.0
    %115 = vmatpush1.msra.mxu0 0.0
    %116 = vmatprep.subr.mxu0 0.0
    %117 = vmatpush1.msra.mxu0 0.0
    %118 = vmatprep.subr.mxu0 0.0
    %119 = vmatpush1.msra.mxu0 0.0
    %120 = vmatprep.subr.mxu0 0.0
    %121 = vmatpush1.msra.mxu0 0.0
    %122 = vmatprep.subr.mxu0 0.0
    %123 = vmatpush1.msra.mxu0 0.0
    %124 = vmatprep.subr.mxu0 0.0
    %125 = vmatpush1.msra.mxu0 0.0
    %126 = vmatprep.subr.mxu0 0.0
    %127 = vmatpush1.msra.mxu0 0.0
    %128 = vmatprep.subr.mxu0 0.0
    %129 = vmatpush1.msra.mxu0 0.0
    %130 = vmatprep.subr.mxu0 0.0
    %131 = vmatpush1.msra.mxu0 0.0
    %132 = vmatprep.subr.mxu0 0.0
    %133 = vmatpush1.msra.mxu0 0.0
    %134 = vmatprep.subr.mxu0 0.0
    %135 = vmatpush1.msra.mxu0 0.0
    %136 = vmatprep.subr.mxu0 0.0
    %137 = vmatpush1.msra.mxu0 0.0
    %138 = vmatprep.subr.mxu0 0.0
    %139 = vmatpush1.msra.mxu0 0.0
    %140 = vmatprep.subr.mxu0 0.0
    %141 = vmatpush1.msra.mxu0 0.0
    %142 = vmatprep.subr.mxu0 0.0
    %143 = vmatpush1.msra.mxu0 0.0
    %144 = vmatprep.subr.mxu0 0.0
    %145 = vmatpush1.msra.mxu0 0.0
    %146 = vmatprep.subr.mxu0 0.0
    %147 = vmatpush1.msra.mxu0 0.0
    %148 = vmatprep.subr.mxu0 0.0
    %149 = vmatpush1.msra.mxu0 0.0
    %150 = vmatprep.subr.mxu0 0.0
    %151 = vmatpush1.msra.mxu0 0.0
    %152 = vmatprep.subr.mxu0 0.0
    %153 = vmatpush1.msra.mxu0 0.0
    %154 = vmatprep.subr.mxu0 0.0
    %155 = vmatpush1.msra.mxu0 0.0
    %156 = vmatprep.subr.mxu0 0.0
    %157 = vmatpush1.msra.mxu0 0.0
    %158 = vmatprep.subr.mxu0 0.0
    %159 = vmatpush1.msra.mxu0 0.0
    %160 = vmatprep.subr.mxu0 0.0
    %161 = vmatpush1.msra.mxu0 0.0
    %162 = vmatprep.mubr.f32.mxu0 0.0
    %163 = vmatmul.mubr.f32.gmra.mrb[0].mxu0 %v51
    %v164 = vpop.f32.mrb[0].mxu0
    %v165 = vadd.f32 %v47, %v164
    %v166 = vpop.f32.mrb[0].mxu0
    %167 = vmatprep.mubr.f32.mxu0 0.0
    %168 = vmatmul.mubr.f32.gmra.mrb[0].mxu0 %v54
    %v169 = vpop.f32.mrb[0].mxu0
    %v170 = vadd.f32 %v47, %v169
    %v171 = vpop.f32.mrb[0].mxu0
    %172 = vmatprep.mubr.f32.mxu0 0.0
    %173 = vmatmul.mubr.f32.gmra.mrb[0].mxu0 %v57
    %v174 = vpop.f32.mrb[0].mxu0
    %v175 = vadd.f32 %v47, %v174
    %v176 = vpop.f32.mrb[0].mxu0
    %177 = vmatprep.mubr.f32.mxu0 0.0
    %178 = vmatmul.mubr.f32.gmra.mrb[0].mxu0 %v60
    %v179 = vpop.f32.mrb[0].mxu0
    %v180 = vadd.f32 %v47, %v179
    %v181 = vpop.f32.mrb[0].mxu0
    %182 = vmatprep.mubr.f32.mxu0 0.0
    %183 = vmatmul.mubr.f32.gmra.mrb[0].mxu0 %v63
    %v184 = vpop.f32.mrb[0].mxu0
    %v185 = vadd.f32 %v47, %v184
    %v186 = vpop.f32.mrb[0].mxu0
    %187 = vmatprep.mubr.f32.mxu0 0.0
    %188 = vmatmul.mubr.f32.gmra.mrb[0].mxu0 %v66
    %v189 = vpop.f32.mrb[0].mxu0
    %v190 = vadd.f32 %v47, %v189
    %v191 = vpop.f32.mrb[0].mxu0
    %192 = vmatprep.mubr.f32.mxu0 0.0
    %193 = vmatmul.mubr.f32.gmra.mrb[0].mxu0 %v69
    %v194 = vpop.f32.mrb[0].mxu0
    %v195 = vadd.f32 %v47, %v194
    %v196 = vpop.f32.mrb[0].mxu0
    %197 = vmatprep.mubr.f32.mxu0 0.0
    %198 = vmatmul.mubr.f32.gmra.mrb[0].mxu0 %v72
    %v199 = vpop.f32.mrb[0].mxu0
    %v200 = vadd.f32 %v47, %v199
    %v201 = vpop.f32.mrb[0].mxu0
    %202 = vmatprep.mubr.f32.mxu0 0.0
    %203 = vmatmul.mubr.f32.gmra.mrb[0].mxu0 %v75
    %v204 = vpop.f32.mrb[0].mxu0
    %v205 = vadd.f32 %v47, %v204
    %v206 = vpop.f32.mrb[0].mxu0
    %207 = vmatprep.mubr.f32.mxu0 0.0
    %208 = vmatmul.mubr.f32.gmra.mrb[0].mxu0 %v78
    %v209 = vpop.f32.mrb[0].mxu0
    %v210 = vadd.f32 %v47, %v209
    %v211 = vpop.f32.mrb[0].mxu0
    %212 = vmatprep.mubr.f32.mxu0 0.0
    %213 = vmatmul.mubr.f32.gmra.mrb[0].mxu0 %v81
    %v214 = vpop.f32.mrb[0].mxu0
    %v215 = vadd.f32 %v47, %v214
    %v216 = vpop.f32.mrb[0].mxu0
    %217 = vmatprep.mubr.f32.mxu0 0.0
    %218 = vmatmul.mubr.f32.gmra.mrb[0].mxu0 %v84
    %v219 = vpop.f32.mrb[0].mxu0
    %v220 = vadd.f32 %v47, %v219
    %v221 = vpop.f32.mrb[0].mxu0
    %222 = vmatprep.mubr.f32.mxu0 0.0
    %223 = vmatmul.mubr.f32.gmra.mrb[0].mxu0 %v87
    %v224 = vpop.f32.mrb[0].mxu0
    %v225 = vadd.f32 %v47, %v224
    %v226 = vpop.f32.mrb[0].mxu0
    %227 = vmatprep.mubr.f32.mxu0 0.0
    %228 = vmatmul.mubr.f32.gmra.mrb[0].mxu0 %v90
    %v229 = vpop.f32.mrb[0].mxu0
    %v230 = vadd.f32 %v47, %v229
    %v231 = vpop.f32.mrb[0].mxu0
    %232 = vmatprep.mubr.f32.mxu0 0.0
    %233 = vmatmul.mubr.f32.gmra.mrb[0].mxu0 %v93
    %v234 = vpop.f32.mrb[0].mxu0
    %v235 = vadd.f32 %v47, %v234
    %v236 = vpop.f32.mrb[0].mxu0
    %237 = vmatprep.mubr.f32.mxu0 0.0
    %238 = vmatmul.mubr.f32.gmra.mrb[0].mxu0 %v96
    %v239 = vpop.f32.mrb[0].mxu0
    %v240 = vadd.f32 %v47, %v239
    %v241 = vpop.f32.mrb[0].mxu0
    %242 = vdwg.mxu0
    %v243 = vmul.f32 %v165, 0.5
    %v244 = vmul.f32 %v170, 0.5
    %v245 = vmul.f32 %v175, 0.5
    %v246 = vmul.f32 %v180, 0.5
    %v247 = vmul.f32 %v185, 0.5
    %v248 = vmul.f32 %v190, 0.5
    %v249 = vmul.f32 %v195, 0.5
    %v250 = vmul.f32 %v200, 0.5
    %v251 = vmul.f32 %v205, 0.5
    %v252 = vmul.f32 %v210, 0.5
    %v253 = vmul.f32 %v215, 0.5
    %v254 = vmul.f32 %v220, 0.5
    %v255 = vmul.f32 %v225, 0.5
    %v256 = vmul.f32 %v230, 0.5
    %v257 = vmul.f32 %v235, 0.5
    %v258 = vmul.f32 %v240, 0.5
    %v259 = vmul.f32 %v165, 0.70710677
    %v260 = vmul.f32 %v170, 0.70710677
    %v261 = vmul.f32 %v175, 0.70710677
    %v262 = vmul.f32 %v180, 0.70710677
    %v263 = vmul.f32 %v185, 0.70710677
    %v264 = vmul.f32 %v190, 0.70710677
    %v265 = vmul.f32 %v195, 0.70710677
    %v266 = vmul.f32 %v200, 0.70710677
    %v267 = vmul.f32 %v205, 0.70710677
    %v268 = vmul.f32 %v210, 0.70710677
    %v269 = vmul.f32 %v215, 0.70710677
    %v270 = vmul.f32 %v220, 0.70710677
    %v271 = vmul.f32 %v225, 0.70710677
    %v272 = vmul.f32 %v230, 0.70710677
    %v273 = vmul.f32 %v235, 0.70710677
    %v274 = vmul.f32 %v240, 0.70710677
    %vm275 = vcmp.ge.f32.partialorder %v259, 0.0
    %vm276 = vcmp.ge.f32.partialorder %v260, 0.0
    %vm277 = vcmp.ge.f32.partialorder %v261, 0.0
    %vm278 = vcmp.ge.f32.partialorder %v262, 0.0
    %vm279 = vcmp.ge.f32.partialorder %v263, 0.0
    %vm280 = vcmp.ge.f32.partialorder %v264, 0.0
    %vm281 = vcmp.ge.f32.partialorder %v265, 0.0
    %vm282 = vcmp.ge.f32.partialorder %v266, 0.0
    %vm283 = vcmp.ge.f32.partialorder %v267, 0.0
    %vm284 = vcmp.ge.f32.partialorder %v268, 0.0
    %vm285 = vcmp.ge.f32.partialorder %v269, 0.0
    %vm286 = vcmp.ge.f32.partialorder %v270, 0.0
    %vm287 = vcmp.ge.f32.partialorder %v271, 0.0
    %vm288 = vcmp.ge.f32.partialorder %v272, 0.0
    %vm289 = vcmp.ge.f32.partialorder %v273, 0.0
    %vm290 = vcmp.ge.f32.partialorder %v274, 0.0
    %v291 = vsel %vm275, 1.0, -1.0
    %v292 = vsel %vm276, 1.0, -1.0
    %v293 = vsel %vm277, 1.0, -1.0
    %v294 = vsel %vm278, 1.0, -1.0
    %v295 = vsel %vm279, 1.0, -1.0
    %v296 = vsel %vm280, 1.0, -1.0
    %v297 = vsel %vm281, 1.0, -1.0
    %v298 = vsel %vm282, 1.0, -1.0
    %v299 = vsel %vm283, 1.0, -1.0
    %v300 = vsel %vm284, 1.0, -1.0
    %v301 = vsel %vm285, 1.0, -1.0
    %v302 = vsel %vm286, 1.0, -1.0
    %v303 = vsel %vm287, 1.0, -1.0
    %v304 = vsel %vm288, 1.0, -1.0
    %v305 = vsel %vm289, 1.0, -1.0
    %v306 = vsel %vm290, 1.0, -1.0
    %v307 = vand.u32 2147483647, %v259
    %v308 = vand.u32 2147483647, %v260
    %v309 = vand.u32 2147483647, %v261
    %v310 = vand.u32 2147483647, %v262
    %v311 = vand.u32 2147483647, %v263
    %v312 = vand.u32 2147483647, %v264
    %v313 = vand.u32 2147483647, %v265
    %v314 = vand.u32 2147483647, %v266
    %v315 = vand.u32 2147483647, %v267
    %v316 = vand.u32 2147483647, %v268
    %v317 = vand.u32 2147483647, %v269
    %v318 = vand.u32 2147483647, %v270
    %v319 = vand.u32 2147483647, %v271
    %v320 = vand.u32 2147483647, %v272
    %v321 = vand.u32 2147483647, %v273
    %v322 = vand.u32 2147483647, %v274
    %v323 = vmul.f32 %v307, 0.3275911
    %v324 = vmul.f32 %v308, 0.3275911
    %v325 = vmul.f32 %v309, 0.3275911
    %v326 = vmul.f32 %v310, 0.3275911
    %v327 = vmul.f32 %v311, 0.3275911
    %v328 = vmul.f32 %v312, 0.3275911
    %v329 = vmul.f32 %v313, 0.3275911
    %v330 = vmul.f32 %v314, 0.3275911
    %v331 = vmul.f32 %v315, 0.3275911
    %v332 = vmul.f32 %v316, 0.3275911
    %v333 = vmul.f32 %v317, 0.3275911
    %v334 = vmul.f32 %v318, 0.3275911
    %v335 = vmul.f32 %v319, 0.3275911
    %v336 = vmul.f32 %v320, 0.3275911
    %v337 = vmul.f32 %v321, 0.3275911
    %v338 = vmul.f32 %v322, 0.3275911
    %v339 = vadd.f32 %v323, 1.0
    %v340 = vadd.f32 %v324, 1.0
    %v341 = vadd.f32 %v325, 1.0
    %v342 = vadd.f32 %v326, 1.0
    %v343 = vadd.f32 %v327, 1.0
    %v344 = vadd.f32 %v328, 1.0
    %v345 = vadd.f32 %v329, 1.0
    %v346 = vadd.f32 %v330, 1.0
    %v347 = vadd.f32 %v331, 1.0
    %v348 = vadd.f32 %v332, 1.0
    %v349 = vadd.f32 %v333, 1.0
    %v350 = vadd.f32 %v334, 1.0
    %v351 = vadd.f32 %v335, 1.0
    %v352 = vadd.f32 %v336, 1.0
    %v353 = vadd.f32 %v337, 1.0
    %v354 = vadd.f32 %v338, 1.0
    %v355 = vrcp.pop %v339
    %v356 = vmul.f32 1.0, %v355
    %v357 = vrcp.pop %v340
    %v358 = vmul.f32 1.0, %v357
    %v359 = vrcp.pop %v341
    %v360 = vmul.f32 1.0, %v359
    %v361 = vrcp.pop %v342
    %v362 = vmul.f32 1.0, %v361
    %v363 = vrcp.pop %v343
    %v364 = vmul.f32 1.0, %v363
    %v365 = vrcp.pop %v344
    %v366 = vmul.f32 1.0, %v365
    %v367 = vrcp.pop %v345
    %v368 = vmul.f32 1.0, %v367
    %v369 = vrcp.pop %v346
    %v370 = vmul.f32 1.0, %v369
    %v371 = vrcp.pop %v347
    %v372 = vmul.f32 1.0, %v371
    %v373 = vrcp.pop %v348
    %v374 = vmul.f32 1.0, %v373
    %v375 = vrcp.pop %v349
    %v376 = vmul.f32 1.0, %v375
    %v377 = vrcp.pop %v350
    %v378 = vmul.f32 1.0, %v377
    %v379 = vrcp.pop %v351
    %v380 = vmul.f32 1.0, %v379
    %v381 = vrcp.pop %v352
    %v382 = vmul.f32 1.0, %v381
    %v383 = vrcp.pop %v353
    %v384 = vmul.f32 1.0, %v383
    %v385 = vrcp.pop %v354
    %v386 = vmul.f32 1.0, %v385
    %v387 = vmul.f32 %v356, 1.0614054
    %v388 = vmul.f32 %v358, 1.0614054
    %v389 = vmul.f32 %v360, 1.0614054
    %v390 = vmul.f32 %v362, 1.0614054
    %v391 = vmul.f32 %v364, 1.0614054
    %v392 = vmul.f32 %v366, 1.0614054
    %v393 = vmul.f32 %v368, 1.0614054
    %v394 = vmul.f32 %v370, 1.0614054
    %v395 = vmul.f32 %v372, 1.0614054
    %v396 = vmul.f32 %v374, 1.0614054
    %v397 = vmul.f32 %v376, 1.0614054
    %v398 = vmul.f32 %v378, 1.0614054
    %v399 = vmul.f32 %v380, 1.0614054
    %v400 = vmul.f32 %v382, 1.0614054
    %v401 = vmul.f32 %v384, 1.0614054
    %v402 = vmul.f32 %v386, 1.0614054
    %v403 = vadd.f32 %v387, -1.4531521
    %v404 = vadd.f32 %v388, -1.4531521
    %v405 = vadd.f32 %v389, -1.4531521
    %v406 = vadd.f32 %v390, -1.4531521
    %v407 = vadd.f32 %v391, -1.4531521
    %v408 = vadd.f32 %v392, -1.4531521
    %v409 = vadd.f32 %v393, -1.4531521
    %v410 = vadd.f32 %v394, -1.4531521
    %v411 = vadd.f32 %v395, -1.4531521
    %v412 = vadd.f32 %v396, -1.4531521
    %v413 = vadd.f32 %v397, -1.4531521
    %v414 = vadd.f32 %v398, -1.4531521
    %v415 = vadd.f32 %v399, -1.4531521
    %v416 = vadd.f32 %v400, -1.4531521
    %v417 = vadd.f32 %v401, -1.4531521
    %v418 = vadd.f32 %v402, -1.4531521
    %v419 = vmul.f32 %v403, %v356
    %v420 = vmul.f32 %v404, %v358
    %v421 = vmul.f32 %v405, %v360
    %v422 = vmul.f32 %v406, %v362
    %v423 = vmul.f32 %v407, %v364
    %v424 = vmul.f32 %v408, %v366
    %v425 = vmul.f32 %v409, %v368
    %v426 = vmul.f32 %v410, %v370
    %v427 = vmul.f32 %v411, %v372
    %v428 = vmul.f32 %v412, %v374
    %v429 = vmul.f32 %v413, %v376
    %v430 = vmul.f32 %v414, %v378
    %v431 = vmul.f32 %v415, %v380
    %v432 = vmul.f32 %v416, %v382
    %v433 = vmul.f32 %v417, %v384
    %v434 = vmul.f32 %v418, %v386
    %v435 = vadd.f32 %v419, 1.4214138
    %v436 = vadd.f32 %v420, 1.4214138
    %v437 = vadd.f32 %v421, 1.4214138
    %v438 = vadd.f32 %v422, 1.4214138
    %v439 = vadd.f32 %v423, 1.4214138
    %v440 = vadd.f32 %v424, 1.4214138
    %v441 = vadd.f32 %v425, 1.4214138
    %v442 = vadd.f32 %v426, 1.4214138
    %v443 = vadd.f32 %v427, 1.4214138
    %v444 = vadd.f32 %v428, 1.4214138
    %v445 = vadd.f32 %v429, 1.4214138
    %v446 = vadd.f32 %v430, 1.4214138
    %v447 = vadd.f32 %v431, 1.4214138
    %v448 = vadd.f32 %v432, 1.4214138
    %v449 = vadd.f32 %v433, 1.4214138
    %v450 = vadd.f32 %v434, 1.4214138
    %v451 = vmul.f32 %v435, %v356
    %v452 = vmul.f32 %v436, %v358
    %v453 = vmul.f32 %v437, %v360
    %v454 = vmul.f32 %v438, %v362
    %v455 = vmul.f32 %v439, %v364
    %v456 = vmul.f32 %v440, %v366
    %v457 = vmul.f32 %v441, %v368
    %v458 = vmul.f32 %v442, %v370
    %v459 = vmul.f32 %v443, %v372
    %v460 = vmul.f32 %v444, %v374
    %v461 = vmul.f32 %v445, %v376
    %v462 = vmul.f32 %v446, %v378
    %v463 = vmul.f32 %v447, %v380
    %v464 = vmul.f32 %v448, %v382
    %v465 = vmul.f32 %v449, %v384
    %v466 = vmul.f32 %v450, %v386
    %v467 = vadd.f32 %v451, -0.28449672
    %v468 = vadd.f32 %v452, -0.28449672
    %v469 = vadd.f32 %v453, -0.28449672
    %v470 = vadd.f32 %v454, -0.28449672
    %v471 = vadd.f32 %v455, -0.28449672
    %v472 = vadd.f32 %v456, -0.28449672
    %v473 = vadd.f32 %v457, -0.28449672
    %v474 = vadd.f32 %v458, -0.28449672
    %v475 = vadd.f32 %v459, -0.28449672
    %v476 = vadd.f32 %v460, -0.28449672
    %v477 = vadd.f32 %v461, -0.28449672
    %v478 = vadd.f32 %v462, -0.28449672
    %v479 = vadd.f32 %v463, -0.28449672
    %v480 = vadd.f32 %v464, -0.28449672
    %v481 = vadd.f32 %v465, -0.28449672
    %v482 = vadd.f32 %v466, -0.28449672
    %v483 = vmul.f32 %v467, %v356
    %v484 = vmul.f32 %v468, %v358
    %v485 = vmul.f32 %v469, %v360
    %v486 = vmul.f32 %v470, %v362
    %v487 = vmul.f32 %v471, %v364
    %v488 = vmul.f32 %v472, %v366
    %v489 = vmul.f32 %v473, %v368
    %v490 = vmul.f32 %v474, %v370
    %v491 = vmul.f32 %v475, %v372
    %v492 = vmul.f32 %v476, %v374
    %v493 = vmul.f32 %v477, %v376
    %v494 = vmul.f32 %v478, %v378
    %v495 = vmul.f32 %v479, %v380
    %v496 = vmul.f32 %v480, %v382
    %v497 = vmul.f32 %v481, %v384
    %v498 = vmul.f32 %v482, %v386
    %v499 = vadd.f32 %v483, 0.2548296
    %v500 = vadd.f32 %v484, 0.2548296
    %v501 = vadd.f32 %v485, 0.2548296
    %v502 = vadd.f32 %v486, 0.2548296
    %v503 = vadd.f32 %v487, 0.2548296
    %v504 = vadd.f32 %v488, 0.2548296
    %v505 = vadd.f32 %v489, 0.2548296
    %v506 = vadd.f32 %v490, 0.2548296
    %v507 = vadd.f32 %v491, 0.2548296
    %v508 = vadd.f32 %v492, 0.2548296
    %v509 = vadd.f32 %v493, 0.2548296
    %v510 = vadd.f32 %v494, 0.2548296
    %v511 = vadd.f32 %v495, 0.2548296
    %v512 = vadd.f32 %v496, 0.2548296
    %v513 = vadd.f32 %v497, 0.2548296
    %v514 = vadd.f32 %v498, 0.2548296
    %v515 = vmul.f32 %v499, %v356
    %v516 = vmul.f32 %v500, %v358
    %v517 = vmul.f32 %v501, %v360
    %v518 = vmul.f32 %v502, %v362
    %v519 = vmul.f32 %v503, %v364
    %v520 = vmul.f32 %v504, %v366
    %v521 = vmul.f32 %v505, %v368
    %v522 = vmul.f32 %v506, %v370
    %v523 = vmul.f32 %v507, %v372
    %v524 = vmul.f32 %v508, %v374
    %v525 = vmul.f32 %v509, %v376
    %v526 = vmul.f32 %v510, %v378
    %v527 = vmul.f32 %v511, %v380
    %v528 = vmul.f32 %v512, %v382
    %v529 = vmul.f32 %v513, %v384
    %v530 = vmul.f32 %v514, %v386
    %v531 = vmul.f32 %v307, %v307
    %v532 = vmul.f32 %v308, %v308
    %v533 = vmul.f32 %v309, %v309
    %v534 = vmul.f32 %v310, %v310
    %v535 = vmul.f32 %v311, %v311
    %v536 = vmul.f32 %v312, %v312
    %v537 = vmul.f32 %v313, %v313
    %v538 = vmul.f32 %v314, %v314
    %v539 = vmul.f32 %v315, %v315
    %v540 = vmul.f32 %v316, %v316
    %v541 = vmul.f32 %v317, %v317
    %v542 = vmul.f32 %v318, %v318
    %v543 = vmul.f32 %v319, %v319
    %v544 = vmul.f32 %v320, %v320
    %v545 = vmul.f32 %v321, %v321
    %v546 = vmul.f32 %v322, %v322
    %v547 = vsub.f32 0.0, %v531
    %v548 = vsub.f32 0.0, %v532
    %v549 = vsub.f32 0.0, %v533
    %v550 = vsub.f32 0.0, %v534
    %v551 = vsub.f32 0.0, %v535
    %v552 = vsub.f32 0.0, %v536
    %v553 = vsub.f32 0.0, %v537
    %v554 = vsub.f32 0.0, %v538
    %v555 = vsub.f32 0.0, %v539
    %v556 = vsub.f32 0.0, %v540
    %v557 = vsub.f32 0.0, %v541
    %v558 = vsub.f32 0.0, %v542
    %v559 = vsub.f32 0.0, %v543
    %v560 = vsub.f32 0.0, %v544
    %v561 = vsub.f32 0.0, %v545
    %v562 = vsub.f32 0.0, %v546
    %v563 = vmul.f32 %v547, 1.442695
    %v564 = vpow.pop %v563
    %v565 = vmul.f32 %v548, 1.442695
    %v566 = vpow.pop %v565
    %v567 = vmul.f32 %v549, 1.442695
    %v568 = vpow.pop %v567
    %v569 = vmul.f32 %v550, 1.442695
    %v570 = vpow.pop %v569
    %v571 = vmul.f32 %v551, 1.442695
    %v572 = vpow.pop %v571
    %v573 = vmul.f32 %v552, 1.442695
    %v574 = vpow.pop %v573
    %v575 = vmul.f32 %v553, 1.442695
    %v576 = vpow.pop %v575
    %v577 = vmul.f32 %v554, 1.442695
    %v578 = vpow.pop %v577
    %v579 = vmul.f32 %v555, 1.442695
    %v580 = vpow.pop %v579
    %v581 = vmul.f32 %v556, 1.442695
    %v582 = vpow.pop %v581
    %v583 = vmul.f32 %v557, 1.442695
    %v584 = vpow.pop %v583
    %v585 = vmul.f32 %v558, 1.442695
    %v586 = vpow.pop %v585
    %v587 = vmul.f32 %v559, 1.442695
    %v588 = vpow.pop %v587
    %v589 = vmul.f32 %v560, 1.442695
    %v590 = vpow.pop %v589
    %v591 = vmul.f32 %v561, 1.442695
    %v592 = vpow.pop %v591
    %v593 = vmul.f32 %v562, 1.442695
    %v594 = vpow.pop %v593
    %v595 = vmul.f32 %v515, %v564
    %v596 = vmul.f32 %v516, %v566
    %v597 = vmul.f32 %v517, %v568
    %v598 = vmul.f32 %v518, %v570
    %v599 = vmul.f32 %v519, %v572
    %v600 = vmul.f32 %v520, %v574
    %v601 = vmul.f32 %v521, %v576
    %v602 = vmul.f32 %v522, %v578
    %v603 = vmul.f32 %v523, %v580
    %v604 = vmul.f32 %v524, %v582
    %v605 = vmul.f32 %v525, %v584
    %v606 = vmul.f32 %v526, %v586
    %v607 = vmul.f32 %v527, %v588
    %v608 = vmul.f32 %v528, %v590
    %v609 = vmul.f32 %v529, %v592
    %v610 = vmul.f32 %v530, %v594
    %v611 = vsub.f32 1.0, %v595
    %v612 = vsub.f32 1.0, %v596
    %v613 = vsub.f32 1.0, %v597
    %v614 = vsub.f32 1.0, %v598
    %v615 = vsub.f32 1.0, %v599
    %v616 = vsub.f32 1.0, %v600
    %v617 = vsub.f32 1.0, %v601
    %v618 = vsub.f32 1.0, %v602
    %v619 = vsub.f32 1.0, %v603
    %v620 = vsub.f32 1.0, %v604
    %v621 = vsub.f32 1.0, %v605
    %v622 = vsub.f32 1.0, %v606
    %v623 = vsub.f32 1.0, %v607
    %v624 = vsub.f32 1.0, %v608
    %v625 = vsub.f32 1.0, %v609
    %v626 = vsub.f32 1.0, %v610
    %v627 = vmul.f32 %v291, %v611
    %v628 = vmul.f32 %v292, %v612
    %v629 = vmul.f32 %v293, %v613
    %v630 = vmul.f32 %v294, %v614
    %v631 = vmul.f32 %v295, %v615
    %v632 = vmul.f32 %v296, %v616
    %v633 = vmul.f32 %v297, %v617
    %v634 = vmul.f32 %v298, %v618
    %v635 = vmul.f32 %v299, %v619
    %v636 = vmul.f32 %v300, %v620
    %v637 = vmul.f32 %v301, %v621
    %v638 = vmul.f32 %v302, %v622
    %v639 = vmul.f32 %v303, %v623
    %v640 = vmul.f32 %v304, %v624
    %v641 = vmul.f32 %v305, %v625
    %v642 = vmul.f32 %v306, %v626
    %v643 = vadd.f32 %v627, 1.0
    %v644 = vadd.f32 %v628, 1.0
    %v645 = vadd.f32 %v629, 1.0
    %v646 = vadd.f32 %v630, 1.0
    %v647 = vadd.f32 %v631, 1.0
    %v648 = vadd.f32 %v632, 1.0
    %v649 = vadd.f32 %v633, 1.0
    %v650 = vadd.f32 %v634, 1.0
    %v651 = vadd.f32 %v635, 1.0
    %v652 = vadd.f32 %v636, 1.0
    %v653 = vadd.f32 %v637, 1.0
    %v654 = vadd.f32 %v638, 1.0
    %v655 = vadd.f32 %v639, 1.0
    %v656 = vadd.f32 %v640, 1.0
    %v657 = vadd.f32 %v641, 1.0
    %v658 = vadd.f32 %v642, 1.0
    %v659 = vmul.f32 %v243, %v643
    %v660 = vmul.f32 %v244, %v644
    %v661 = vmul.f32 %v245, %v645
    %v662 = vmul.f32 %v246, %v646
    %v663 = vmul.f32 %v247, %v647
    %v664 = vmul.f32 %v248, %v648
    %v665 = vmul.f32 %v249, %v649
    %v666 = vmul.f32 %v250, %v650
    %v667 = vmul.f32 %v251, %v651
    %v668 = vmul.f32 %v252, %v652
    %v669 = vmul.f32 %v253, %v653
    %v670 = vmul.f32 %v254, %v654
    %v671 = vmul.f32 %v255, %v655
    %v672 = vmul.f32 %v256, %v656
    %v673 = vmul.f32 %v257, %v657
    %v674 = vmul.f32 %v258, %v658
    %v675 = vld [vmem:[%s3] sm:$0x1]
    %v677 = vlaneseq
    %v678 = vshrl.u32 %v677, 7
    %v679 = vsub.s32 0, %v678
    %v680 = vrot.slane %v675, %v679
    %v682 = vmul.f32 %v659, %v680
    %v683 = vmul.f32 %v660, %v680
    %v684 = vmul.f32 %v661, %v680
    %v685 = vmul.f32 %v662, %v680
    %v686 = vmul.f32 %v663, %v680
    %v687 = vmul.f32 %v664, %v680
    %v688 = vmul.f32 %v665, %v680
    %v689 = vmul.f32 %v666, %v680
    %v690 = vmul.f32 %v667, %v680
    %v691 = vmul.f32 %v668, %v680
    %v692 = vmul.f32 %v669, %v680
    %v693 = vmul.f32 %v670, %v680
    %v694 = vmul.f32 %v671, %v680
    %v695 = vmul.f32 %v672, %v680
    %v696 = vmul.f32 %v673, %v680
    %v697 = vmul.f32 %v674, %v680
    %vm698 = vcmask 523264
    %v699 = vsel %vm698, %v682, 0.0
    %700 = vadd.xlane.f32.xlu0 %v699
    %v701 = vpop.xlane.xlu0 %700
    %v702 = vsel %vm698, %v683, 0.0
    %703 = vadd.xlane.f32.xlu0 %v702
    %v704 = vpop.xlane.xlu0 %703
    %v705 = vsel %vm698, %v684, 0.0
    %706 = vadd.xlane.f32.xlu0 %v705
    %v707 = vpop.xlane.xlu0 %706
    %v708 = vsel %vm698, %v685, 0.0
    %709 = vadd.xlane.f32.xlu0 %v708
    %v710 = vpop.xlane.xlu0 %709
    %v711 = vsel %vm698, %v686, 0.0
    %712 = vadd.xlane.f32.xlu0 %v711
    %v713 = vpop.xlane.xlu0 %712
    %v714 = vsel %vm698, %v687, 0.0
    %715 = vadd.xlane.f32.xlu0 %v714
    %v716 = vpop.xlane.xlu0 %715
    %v717 = vsel %vm698, %v688, 0.0
    %718 = vadd.xlane.f32.xlu0 %v717
    %v719 = vpop.xlane.xlu0 %718
    %v720 = vsel %vm698, %v689, 0.0
    %721 = vadd.xlane.f32.xlu0 %v720
    %v722 = vpop.xlane.xlu0 %721
    %v723 = vsel %vm698, %v690, 0.0
    %724 = vadd.xlane.f32.xlu0 %v723
    %v725 = vpop.xlane.xlu0 %724
    %v726 = vsel %vm698, %v691, 0.0
    %727 = vadd.xlane.f32.xlu0 %v726
    %v728 = vpop.xlane.xlu0 %727
    %v729 = vsel %vm698, %v692, 0.0
    %730 = vadd.xlane.f32.xlu0 %v729
    %v731 = vpop.xlane.xlu0 %730
    %v732 = vsel %vm698, %v693, 0.0
    %733 = vadd.xlane.f32.xlu0 %v732
    %v734 = vpop.xlane.xlu0 %733
    %v735 = vsel %vm698, %v694, 0.0
    %736 = vadd.xlane.f32.xlu0 %v735
    %v737 = vpop.xlane.xlu0 %736
    %v738 = vsel %vm698, %v695, 0.0
    %739 = vadd.xlane.f32.xlu0 %v738
    %v740 = vpop.xlane.xlu0 %739
    %v741 = vsel %vm698, %v696, 0.0
    %742 = vadd.xlane.f32.xlu0 %v741
    %v743 = vpop.xlane.xlu0 %742
    %v744 = vsel %vm698, %v697, 0.0
    %745 = vadd.xlane.f32.xlu0 %v744
    %v746 = vpop.xlane.xlu0 %745
    %747 = vxpose.xlu0.b32.start [1/16] %v701, 128
    %748 = vxpose.xlu0.b32.cont [2/16] %v704, 128
    %749 = vxpose.xlu0.b32.cont [3/16] %v707, 128
    %750 = vxpose.xlu0.b32.cont [4/16] %v710, 128
    %751 = vxpose.xlu0.b32.cont [5/16] %v713, 128
    %752 = vxpose.xlu0.b32.cont [6/16] %v716, 128
    %753 = vxpose.xlu0.b32.cont [7/16] %v719, 128
    %754 = vxpose.xlu0.b32.cont [8/16] %v722, 128
    %755 = vxpose.xlu0.b32.cont [9/16] %v725, 128
    %756 = vxpose.xlu0.b32.cont [10/16] %v728, 128
    %757 = vxpose.xlu0.b32.cont [11/16] %v731, 128
    %758 = vxpose.xlu0.b32.cont [12/16] %v734, 128
    %759 = vxpose.xlu0.b32.cont [13/16] %v737, 128
    %760 = vxpose.xlu0.b32.cont [14/16] %v740, 128
    %761 = vxpose.xlu0.b32.cont [15/16] %v743, 128
    %762 = vxpose.xlu0.b32.end [16/16] %v746, 128
    %v763 = vpop.trf.xlu0
    %v764 = vpop.trf.xlu0
    %v765 = vpop.trf.xlu0
    %v766 = vpop.trf.xlu0
    %v767 = vpop.trf.xlu0
    %v768 = vpop.trf.xlu0
    %v769 = vpop.trf.xlu0
    %v770 = vpop.trf.xlu0
    %v771 = vpop.trf.xlu0
    %v772 = vpop.trf.xlu0
    %v773 = vpop.trf.xlu0
    %v774 = vpop.trf.xlu0
    %v775 = vpop.trf.xlu0
    %v776 = vpop.trf.xlu0
    %v777 = vpop.trf.xlu0
    %v778 = vpop.trf.xlu0
    %s779 = sld [smem:[#allocation2]]
    %v780 = vstv %s779
    %v781 = vadd.f32 %v763, %v780
    %v782 = vsub.f32 0.0, %v781
    %v783 = vmul.f32 %v782, 1.442695
    %v784 = vpow.pop %v783
    %v785 = vadd.f32 %v784, 1.0
    %v786 = vrcp.pop %v785
    %v787 = vmul.f32 1.0, %v786
    %788 = vst [vmem:[#allocation3] sm:$0x1] %v787
    // Predicated region
    $region22: #{tpu_custom_call.1} parent=1 // pred_check
      _
    $region23: #{tpu_custom_call.1} parent=1 // pred_check_branch
      %790 = sbr.rel (0) target = $region25
    $region24: #{tpu_custom_call.1} parent=1 // pred_region
      %s792 = ssub.s32 16, 16
      %793 = vsyncadd [#allocation4], %s792
      %s795 = sshll.u32 [#allocation3], 4
      %s796 = int_to_ptr.vmem [resolvable:$true] %s795
      %798 = dma.vmem_to_hbm [thread:$0]  %s796, 16, %s5, [#allocation4]
    $region25: #{tpu_custom_call.1} parent=1 // pred_fallthru
      _
    // Predicated region
    $region26: #{tpu_custom_call.1} parent=1 // pred_check
      _
    $region27: #{tpu_custom_call.1} parent=1 // pred_check_branch
      %800 = sbr.rel (0) target = $region29
    $region28: #{tpu_custom_call.1} parent=1 // pred_region
      %801 = dma.done [#allocation4], 16
    $region29: #{tpu_custom_call.1} parent=1 // pred_fallthru
      _
    %802 = vsyncpa [#allocation4], 1

</llo_original>
